<compile_context>
chip_gen: v7x
topology: tpu7x:2x2x1
jax: 0.10.0
libtpu: 0.0.40
codegen_flags: <defaults>
</compile_context>

<pallas_src>
import jax
import jax.numpy as jnp
from jax.experimental import pallas as pl
from jax.experimental.pallas import tpu as pltpu


def _round_up(x, m):
    return ((x + m - 1) // m) * m


def _augru_kernel(x_ref, h_ref, att_ref, wx_ref, wh_ref, b_ref, out_ref):
    H = out_ref.shape[-1]

    # One packed gate slab per batch tile: (Bt, 4H) = [r | z | i_n | h_n].
    g = (jnp.dot(x_ref[...], wx_ref[...], preferred_element_type=jnp.float32)
         + jnp.dot(h_ref[...], wh_ref[...], preferred_element_type=jnp.float32)
         + b_ref[...])

    s = jax.nn.sigmoid(g)                                   # lanes 0:2H useful

    # Align every gate to lanes [0:H]; rolls run on the XLU, slices at lane
    # offset 0 need no lane movement.
    r = s[:, 0:H]                                           # reset gate
    z = pltpu.roll(s, shift=3 * H, axis=1)[:, 0:H]          # update gate
    i_n = pltpu.roll(g, shift=2 * H, axis=1)[:, 0:H]        # input new-state
    h_n = pltpu.roll(g, shift=H, axis=1)[:, 0:H]            # hidden new-state

    new_state = jnp.tanh(i_n + r * h_n)

    u = att_ref[...] * z                                    # attentional update gate
    h = h_ref[...].astype(jnp.float32)
    # (1-u)*h + u*n  ==  h + u*(n - h)
    out_ref[...] = (h + u * (new_state - h)).astype(out_ref.dtype)


def prepare_augru_params(weight_ih, weight_hh, bias_ih, bias_hh):
    """Pack PyTorch-layout AUGRU params into the kernel layout.

    Call ONCE per parameter set (hoist out of the per-step / per-time-step
    path).  Gate slab layout along lanes: [0:H]=r, [H:2H]=z, [2H:3H]=i_n,
    [3H:4H]=h_n, with the r/z biases folded to b_ih+b_hh and b_in / b_hn kept
    separate (b_hn stays inside the reset product, as in PyTorch).
    """
    w_ih = jnp.asarray(weight_ih, jnp.float32)          # (3H, I)
    w_hh = jnp.asarray(weight_hh, jnp.float32)          # (3H, H)
    H3, I = w_ih.shape
    H = H3 // 3
    if bias_ih is None:
        bias_ih = jnp.zeros((3 * H,), jnp.float32)
    if bias_hh is None:
        bias_hh = jnp.zeros((3 * H,), jnp.float32)
    b_ih = jnp.asarray(bias_ih, jnp.float32)
    b_hh = jnp.asarray(bias_hh, jnp.float32)

    wx = jnp.zeros((I, 4 * H), jnp.float32)
    wx = wx.at[:, 0:H].set(w_ih[0:H].T)                 # r (x part)
    wx = wx.at[:, H:2 * H].set(w_ih[H:2 * H].T)         # z (x part)
    wx = wx.at[:, 2 * H:3 * H].set(w_ih[2 * H:3 * H].T) # i_n
    # lanes 3H:4H stay zero (h_n has no x contribution)

    wh = jnp.zeros((H, 4 * H), jnp.float32)
    wh = wh.at[:, 0:H].set(w_hh[0:H].T)                 # r (h part)
    wh = wh.at[:, H:2 * H].set(w_hh[H:2 * H].T)         # z (h part)
    wh = wh.at[:, 3 * H:4 * H].set(w_hh[2 * H:3 * H].T) # h_n
    # lanes 2H:3H stay zero (i_n has no h contribution)

    b = jnp.zeros((1, 4 * H), jnp.float32)
    b = b.at[0, 0:H].set(b_ih[0:H] + b_hh[0:H])                 # r
    b = b.at[0, H:2 * H].set(b_ih[H:2 * H] + b_hh[H:2 * H])     # z
    b = b.at[0, 2 * H:3 * H].set(b_ih[2 * H:3 * H])             # i_n
    b = b.at[0, 3 * H:4 * H].set(b_hh[2 * H:3 * H])             # h_n
    return wx, wh, b


def augru_cell_packed(inputs, hx, att_score, wx, wh, b, *, bt_cap=2048):
    """AUGRU cell step with pre-packed params (see prepare_augru_params)."""
    B, I = inputs.shape
    H = hx.shape[-1]

    x = jnp.asarray(inputs, jnp.float32)
    h = jnp.asarray(hx, jnp.float32)
    att = jnp.asarray(att_score, jnp.float32).reshape(-1, 1)   # view(-1, 1)

    # Adaptive batch tile: big tiles for HBM efficiency, <8 wasted rows / tile.
    num_tiles = max(1, -(-B // bt_cap))
    Bt = _round_up(-(-B // num_tiles), 8)
    Bp = num_tiles * Bt
    if Bp != B:
        x = jnp.pad(x, ((0, Bp - B), (0, 0)))
        h = jnp.pad(h, ((0, Bp - B), (0, 0)))
        att = jnp.pad(att, ((0, Bp - B), (0, 0)))

    out = pl.pallas_call(
        _augru_kernel,
        out_shape=jax.ShapeDtypeStruct((Bp, H), jnp.float32),
        grid=(num_tiles,),
        in_specs=[
            pl.BlockSpec((Bt, I), lambda i: (i, 0)),        # x   (batch-tiled)
            pl.BlockSpec((Bt, H), lambda i: (i, 0)),        # h   (batch-tiled)
            pl.BlockSpec((Bt, 1), lambda i: (i, 0)),        # att (batch-tiled)
            pl.BlockSpec((I, 4 * H), lambda i: (0, 0)),     # Wx  (resident)
            pl.BlockSpec((H, 4 * H), lambda i: (0, 0)),     # Wh  (resident)
            pl.BlockSpec((1, 4 * H), lambda i: (0, 0)),     # b   (resident)
        ],
        out_specs=pl.BlockSpec((Bt, H), lambda i: (i, 0)),  # natural-width store
        compiler_params=pltpu.CompilerParams(
            dimension_semantics=("parallel",)),
    )(x, h, att, wx, wh, b)

    if Bp != B:
        out = out[:B]
    return out.astype(inputs.dtype)


def augru_cell(inputs, hx, att_score, weight_ih, weight_hh, bias_ih, bias_hh):
    """Functional equivalent of AUGRUCell.forward (PyTorch param layout).

    inputs:    (B, input_size)
    hx:        (B, hidden_size)
    att_score: (B,) or (B, 1)
    weight_ih: (3*hidden_size, input_size)
    weight_hh: (3*hidden_size, hidden_size)
    bias_ih, bias_hh: (3*hidden_size,) or None
    returns:   (B, hidden_size)
    """
    wx, wh, b = prepare_augru_params(weight_ih, weight_hh, bias_ih, bias_hh)
    return augru_cell_packed(inputs, hx, att_score, wx, wh, b)


def _reference(inputs, hx, att_score, weight_ih, weight_hh, bias_ih, bias_hh):
    gi = inputs @ weight_ih.T + bias_ih
    gh = hx @ weight_hh.T + bias_hh
    H = hx.shape[-1]
    i_r, i_z, i_n = gi[:, :H], gi[:, H:2 * H], gi[:, 2 * H:]
    h_r, h_z, h_n = gh[:, :H], gh[:, H:2 * H], gh[:, 2 * H:]
    reset_gate = jax.nn.sigmoid(i_r + h_r)
    update_gate = jax.nn.sigmoid(i_z + h_z)
    new_state = jnp.tanh(i_n + reset_gate * h_n)
    att = att_score.reshape(-1, 1)
    update_gate = att * update_gate
    return (1.0 - update_gate) * hx + update_gate * new_state


if __name__ == "__main__":
    B, INPUT_SIZE, HIDDEN_SIZE = 8, 16, 32

    key = jax.random.PRNGKey(0)
    k_x, k_h, k_a, k_wih, k_whh = jax.random.split(key, 5)

    inputs = jax.random.normal(k_x, (B, INPUT_SIZE), dtype=jnp.float32)
    hx = jax.random.normal(k_h, (B, HIDDEN_SIZE), dtype=jnp.float32)
    att_score = jax.random.uniform(k_a, (B,), dtype=jnp.float32)

    # Deterministic parameter init (the module zero-inits biases in __init__).
    weight_ih = 0.1 * jax.random.normal(k_wih, (3 * HIDDEN_SIZE, INPUT_SIZE),
                                        dtype=jnp.float32)
    weight_hh = 0.1 * jax.random.normal(k_whh, (3 * HIDDEN_SIZE, HIDDEN_SIZE),
                                        dtype=jnp.float32)
    bias_ih = jnp.zeros((3 * HIDDEN_SIZE,), dtype=jnp.float32)
    bias_hh = jnp.zeros((3 * HIDDEN_SIZE,), dtype=jnp.float32)

    # Pack params ONCE (hoisted out of the hot path), then run the cell step.
    wx, wh, b = prepare_augru_params(weight_ih, weight_hh, bias_ih, bias_hh)
    hy = augru_cell_packed(inputs, hx, att_score, wx, wh, b)
    hy = jax.block_until_ready(hy)

    ref = _reference(inputs, hx, att_score,
                     weight_ih, weight_hh, bias_ih, bias_hh)
    assert hy.shape == (B, HIDDEN_SIZE)
    assert jnp.allclose(hy, ref, atol=1e-5, rtol=1e-5)

    print("KERNEL_OK")
</pallas_src>

<mosaic_0001>
module attributes {stable_mosaic.version = 11 : i64} {
  func.func @_augru_kernel(%arg0: i32, %arg1: memref<8x16xf32, #tpu.memory_space<vmem>>, %arg2: memref<8x32xf32, #tpu.memory_space<vmem>>, %arg3: memref<8x1xf32, #tpu.memory_space<vmem>>, %arg4: memref<16x128xf32, #tpu.memory_space<vmem>>, %arg5: memref<32x128xf32, #tpu.memory_space<vmem>>, %arg6: memref<1x128xf32, #tpu.memory_space<vmem>>, %arg7: memref<8x32xf32, #tpu.memory_space<vmem>>) attributes {dimension_semantics = [#tpu.dimension_semantics<parallel>], iteration_bounds = array<i64: 1>, scalar_prefetch = 0 : i64, scratch_operands = 0 : i64, tpu.core_type = #tpu.core_type<tc>, window_params = [{transform_indices = @transform_0, window_bounds = array<i64: 8, 16>}, {transform_indices = @transform_1, window_bounds = array<i64: 8, 32>}, {transform_indices = @transform_2, window_bounds = array<i64: 8, 1>}, {pipeline_mode = #tpu.pipeline_mode<synchronous>, transform_indices = @transform_3, window_bounds = array<i64: 16, 128>}, {pipeline_mode = #tpu.pipeline_mode<synchronous>, transform_indices = @transform_4, window_bounds = array<i64: 32, 128>}, {pipeline_mode = #tpu.pipeline_mode<synchronous>, transform_indices = @transform_5, window_bounds = array<i64: 1, 128>}, {transform_indices = @transform_6, window_bounds = array<i64: 8, 32>}]} {
    %c0 = arith.constant 0 : index
    %c0_0 = arith.constant 0 : index
    %0 = vector.load %arg1[%c0, %c0_0] : memref<8x16xf32, #tpu.memory_space<vmem>>, vector<8x16xf32>
    %c0_1 = arith.constant 0 : index
    %c0_2 = arith.constant 0 : index
    %1 = vector.load %arg4[%c0_1, %c0_2] : memref<16x128xf32, #tpu.memory_space<vmem>>, vector<16x128xf32>
    %cst = arith.constant dense<0.000000e+00> : vector<8x128xf32>
    %2 = tpu.matmul %0, %1, %cst {dimension_numbers = #tpu.dot_dimension_numbers<[1], [0], [0], [1], [0, 0, 1, 1], [], []>} : vector<8x16xf32>, vector<16x128xf32>, vector<8x128xf32> -> vector<8x128xf32>
    %c0_3 = arith.constant 0 : index
    %c0_4 = arith.constant 0 : index
    %3 = vector.load %arg2[%c0_3, %c0_4] : memref<8x32xf32, #tpu.memory_space<vmem>>, vector<8x32xf32>
    %c0_5 = arith.constant 0 : index
    %c0_6 = arith.constant 0 : index
    %4 = vector.load %arg5[%c0_5, %c0_6] : memref<32x128xf32, #tpu.memory_space<vmem>>, vector<32x128xf32>
    %cst_7 = arith.constant dense<0.000000e+00> : vector<8x128xf32>
    %5 = tpu.matmul %3, %4, %cst_7 {dimension_numbers = #tpu.dot_dimension_numbers<[1], [0], [0], [1], [0, 0, 1, 1], [], []>} : vector<8x32xf32>, vector<32x128xf32>, vector<8x128xf32> -> vector<8x128xf32>
    %6 = arith.addf %2, %5 : vector<8x128xf32>
    %c0_8 = arith.constant 0 : index
    %c0_9 = arith.constant 0 : index
    %7 = vector.load %arg6[%c0_8, %c0_9] : memref<1x128xf32, #tpu.memory_space<vmem>>, vector<1x128xf32>
    %8 = vector.broadcast %7 : vector<1x128xf32> to vector<8x128xf32>
    %9 = arith.addf %6, %8 : vector<8x128xf32>
    %10 = arith.negf %9 : vector<8x128xf32>
    %11 = math.exp %10 : vector<8x128xf32>
    %cst_10 = arith.constant 1.000000e+00 : f32
    %12 = vector.broadcast %cst_10 : f32 to vector<8x128xf32>
    %13 = arith.addf %12, %11 : vector<8x128xf32>
    %14 = arith.divf %12, %13 : vector<8x128xf32>
    %15 = vector.extract_strided_slice %14 {offsets = [0, 0], sizes = [8, 32], strides = [1, 1]} : vector<8x128xf32> to vector<8x32xf32>
    %c96_i32 = arith.constant 96 : i32
    %16 = tpu.dynamic_rotate %14 by %c96_i32 dim 1 : vector<8x128xf32>, i32 -> vector<8x128xf32>
    %17 = vector.extract_strided_slice %16 {offsets = [0, 0], sizes = [8, 32], strides = [1, 1]} : vector<8x128xf32> to vector<8x32xf32>
    %c64_i32 = arith.constant 64 : i32
    %18 = tpu.dynamic_rotate %9 by %c64_i32 dim 1 : vector<8x128xf32>, i32 -> vector<8x128xf32>
    %19 = vector.extract_strided_slice %18 {offsets = [0, 0], sizes = [8, 32], strides = [1, 1]} : vector<8x128xf32> to vector<8x32xf32>
    %c32_i32 = arith.constant 32 : i32
    %20 = tpu.dynamic_rotate %9 by %c32_i32 dim 1 : vector<8x128xf32>, i32 -> vector<8x128xf32>
    %21 = vector.extract_strided_slice %20 {offsets = [0, 0], sizes = [8, 32], strides = [1, 1]} : vector<8x128xf32> to vector<8x32xf32>
    %22 = arith.mulf %15, %21 : vector<8x32xf32>
    %23 = arith.addf %19, %22 : vector<8x32xf32>
    %24 = math.tanh %23 : vector<8x32xf32>
    %c0_11 = arith.constant 0 : index
    %c0_12 = arith.constant 0 : index
    %25 = vector.load %arg3[%c0_11, %c0_12] : memref<8x1xf32, #tpu.memory_space<vmem>>, vector<8x1xf32>
    %26 = vector.broadcast %25 : vector<8x1xf32> to vector<8x32xf32>
    %27 = arith.mulf %26, %17 : vector<8x32xf32>
    %c0_13 = arith.constant 0 : index
    %c0_14 = arith.constant 0 : index
    %28 = vector.load %arg2[%c0_13, %c0_14] : memref<8x32xf32, #tpu.memory_space<vmem>>, vector<8x32xf32>
    %29 = arith.subf %24, %28 : vector<8x32xf32>
    %30 = arith.mulf %27, %29 : vector<8x32xf32>
    %31 = arith.addf %28, %30 : vector<8x32xf32>
    %c0_15 = arith.constant 0 : index
    %c0_16 = arith.constant 0 : index
    %32 = vector.load %arg7[%c0_15, %c0_16] : memref<8x32xf32, #tpu.memory_space<vmem>>, vector<8x32xf32>
    tpu.vector_store %arg7[%c0_15, %c0_16], %31 {strides = array<i32>} : memref<8x32xf32, #tpu.memory_space<vmem>>, vector<8x32xf32>,
    return
  }
  func.func @transform_0(%arg0: i32) -> (i32, i32) {
    %c0_i32 = arith.constant 0 : i32
    %c0_i32_0 = arith.constant 0 : i32
    return %arg0, %c0_i32 : i32, i32
  }
  func.func @transform_1(%arg0: i32) -> (i32, i32) {
    %c0_i32 = arith.constant 0 : i32
    %c0_i32_0 = arith.constant 0 : i32
    return %arg0, %c0_i32 : i32, i32
  }
  func.func @transform_2(%arg0: i32) -> (i32, i32) {
    %c0_i32 = arith.constant 0 : i32
    %c0_i32_0 = arith.constant 0 : i32
    return %arg0, %c0_i32 : i32, i32
  }
  func.func @transform_3(%arg0: i32) -> (i32, i32) {
    %c0_i32 = arith.constant 0 : i32
    %c0_i32_0 = arith.constant 0 : i32
    %c0_i32_1 = arith.constant 0 : i32
    return %c0_i32, %c0_i32_0 : i32, i32
  }
  func.func @transform_4(%arg0: i32) -> (i32, i32) {
    %c0_i32 = arith.constant 0 : i32
    %c0_i32_0 = arith.constant 0 : i32
    %c0_i32_1 = arith.constant 0 : i32
    return %c0_i32, %c0_i32_0 : i32, i32
  }
  func.func @transform_5(%arg0: i32) -> (i32, i32) {
    %c0_i32 = arith.constant 0 : i32
    %c0_i32_0 = arith.constant 0 : i32
    %c0_i32_1 = arith.constant 0 : i32
    return %c0_i32, %c0_i32_0 : i32, i32
  }
  func.func @transform_6(%arg0: i32) -> (i32, i32) {
    %c0_i32 = arith.constant 0 : i32
    %c0_i32_0 = arith.constant 0 : i32
    return %arg0, %c0_i32 : i32, i32
  }
}

</mosaic_0001>

<llo_original>
// kernel: tpu_custom_call.1
$region0: #{tpu_custom_call.1}
  #allocation0 [shape = 'u32[]', space=smem, size = 0x4, offset = 0x4, fixed_abs, tag = 'smem constant byte address 0x4 - core index']
  #allocation1 [shape = 'u32[144,128]{1,0:T(1,128)}', space=vmem, size = 0x12000, scoped, tag = 'internal scratch']
  %s0 = inlined_call_operand.hbm [shape: f32[8,16], index: 0, kind: input, shape index: {}]
  %s1 = inlined_call_operand.hbm [shape: f32[8,32], index: 1, kind: input, shape index: {}]
  %s2 = inlined_call_operand.vmem [shape: f32[8,1], index: 2, kind: input, shape index: {}]
  %s3 = inlined_call_operand.vmem [shape: f32[16,128], index: 3, kind: input, shape index: {}]
  %s4 = inlined_call_operand.hbm [shape: f32[32,128], index: 4, kind: input, shape index: {}]
  %s5 = inlined_call_operand.vmem [shape: f32[1,128], index: 5, kind: input, shape index: {}]
  %s6 = inlined_call_operand.hbm [shape: f32[8,32], index: 6, kind: output, shape index: {}]
  %s7 = sld [smem:[#allocation0]]
  $region46: #{tpu_custom_call.1} parent=0
    _
  %s9 = ssub.s32 1, %s7
  %s10 = scalar_select 0, %s9, %s7
  $region1: #{tpu_custom_call.1} parent=0
    #allocation2 [shape = 'u8[4096]{0}', space=vmem, size = 0x1000, scoped, tag = 'input window, operand 0, single buffered']
    #allocation3 [shape = 's32[1]{0}', space=sflag, size = 0x4, scoped, tag = 'scoped memory for tpu_custom_call.1']
    #allocation4 [shape = 's32[1]{0}', space=sflag, size = 0x4, scoped, tag = 'scoped memory for tpu_custom_call.1']
    #allocation5 [shape = 'u8[4096]{0}', space=vmem, size = 0x1000, scoped, tag = 'input window, operand 1, single buffered']
    #allocation6 [shape = 's32[1]{0}', space=sflag, size = 0x4, scoped, tag = 'scoped memory for tpu_custom_call.1']
    #allocation7 [shape = 'u8[16384]{0}', space=vmem, size = 0x4000, scoped, tag = 'input window, operand 4, single buffered']
    #allocation8 [shape = 'u8[4096]{0}', space=vmem, size = 0x1000, scoped, tag = 'output window, operand 0, single buffered']
    %11 = vsyncpa [#allocation3], 0
    %12 = vsyncpa [#allocation6], 0
    %13 = vsyncpa [#allocation4], 0
    // Predicated region
    $region2: #{tpu_custom_call.1} parent=1 // pred_check
      _
    $region3: #{tpu_custom_call.1} parent=1 // pred_check_branch
      %15 = sbr.rel (0) target = $region5
    $region4: #{tpu_custom_call.1} parent=1 // pred_region
      %s17 = ssub.s32 128, 128
      %18 = vsyncadd [#allocation3], %s17
      %s20 = sshll.u32 [#allocation2], 4
      %s21 = int_to_ptr.vmem [resolvable:$true] %s20
      %23 = dma.hbm_to_vmem [thread:$0]  %s0, 128, %s21, [#allocation3]
    $region5: #{tpu_custom_call.1} parent=1 // pred_fallthru
      _
    // Predicated region
    $region6: #{tpu_custom_call.1} parent=1 // pred_check
      _
    $region7: #{tpu_custom_call.1} parent=1 // pred_check_branch
      %25 = sbr.rel (0) target = $region9
    $region8: #{tpu_custom_call.1} parent=1 // pred_region
      %s27 = ssub.s32 128, 128
      %28 = vsyncadd [#allocation6], %s27
      %s30 = sshll.u32 [#allocation5], 4
      %s31 = int_to_ptr.vmem [resolvable:$true] %s30
      %33 = dma.hbm_to_vmem [thread:$0]  %s1, 128, %s31, [#allocation6]
    $region9: #{tpu_custom_call.1} parent=1 // pred_fallthru
      _
    // Predicated region
    $region10: #{tpu_custom_call.1} parent=1 // pred_check
      _
    $region11: #{tpu_custom_call.1} parent=1 // pred_check_branch
      %35 = sbr.rel (0) target = $region13
    $region12: #{tpu_custom_call.1} parent=1 // pred_region
      _
    $region13: #{tpu_custom_call.1} parent=1 // pred_fallthru
      _
    // Predicated region
    $region14: #{tpu_custom_call.1} parent=1 // pred_check
      _
    $region15: #{tpu_custom_call.1} parent=1 // pred_check_branch
      %37 = sbr.rel (0) target = $region17
    $region16: #{tpu_custom_call.1} parent=1 // pred_region
      _
    $region17: #{tpu_custom_call.1} parent=1 // pred_fallthru
      _
    // Predicated region
    $region18: #{tpu_custom_call.1} parent=1 // pred_check
      _
    $region19: #{tpu_custom_call.1} parent=1 // pred_check_branch
      %39 = sbr.rel (0) target = $region21
    $region20: #{tpu_custom_call.1} parent=1 // pred_region
      %s41 = ssub.s32 512, 512
      %42 = vsyncadd [#allocation6], %s41
      %s43 = sshll.u32 [#allocation7], 4
      %s44 = int_to_ptr.vmem [resolvable:$true] %s43
      %49 = dma.hbm_to_vmem [thread:$0]  %s4, 512, %s44, [#allocation6], 128, 128, 8
    $region21: #{tpu_custom_call.1} parent=1 // pred_fallthru
      _
    // Predicated region
    $region22: #{tpu_custom_call.1} parent=1 // pred_check
      _
    $region23: #{tpu_custom_call.1} parent=1 // pred_check_branch
      %51 = sbr.rel (0) target = $region25
    $region24: #{tpu_custom_call.1} parent=1 // pred_region
      _
    $region25: #{tpu_custom_call.1} parent=1 // pred_fallthru
      _
    // Predicated region
    $region26: #{tpu_custom_call.1} parent=1 // pred_check
      _
    $region27: #{tpu_custom_call.1} parent=1 // pred_check_branch
      %53 = sbr.rel (0) target = $region29
    $region28: #{tpu_custom_call.1} parent=1 // pred_region
      %54 = dma.done [#allocation3], 128
    $region29: #{tpu_custom_call.1} parent=1 // pred_fallthru
      _
    // Predicated region
    $region30: #{tpu_custom_call.1} parent=1 // pred_check
      _
    $region31: #{tpu_custom_call.1} parent=1 // pred_check_branch
      %56 = sbr.rel (0) target = $region33
    $region32: #{tpu_custom_call.1} parent=1 // pred_region
      %57 = dma.done [#allocation6], 128
    $region33: #{tpu_custom_call.1} parent=1 // pred_fallthru
      _
    // Predicated region
    $region34: #{tpu_custom_call.1} parent=1 // pred_check
      _
    $region35: #{tpu_custom_call.1} parent=1 // pred_check_branch
      %59 = sbr.rel (0) target = $region37
    $region36: #{tpu_custom_call.1} parent=1 // pred_region
      %60 = dma.done [#allocation6], 512
    $region37: #{tpu_custom_call.1} parent=1 // pred_fallthru
      _
    %v61 = vld [vmem:[#allocation2] sm:$0xff]
    %v62 = vld [vmem:[%s3] sm:$0xff]
    %v63 = vld [vmem:[%s3 + $0x8] sm:$0xff]
    %v64 = vld [vmem:[#allocation5] sm:$0xff]
    %v65 = vld [vmem:[#allocation7] sm:$0xff]
    %v66 = vld [vmem:[#allocation7 + $0x8] sm:$0xff]
    %v67 = vld [vmem:[#allocation7 + $0x10] sm:$0xff]
    %v68 = vld [vmem:[#allocation7 + $0x18] sm:$0xff]
    %vm69 = vcmask 261120
    %v71 = vsel %vm69, %v64, 0
    %73 = vmatprep.subr.mxu0 0.0
    %74 = vmatpush1.msra.mxu0 %v65
    %75 = vmatprep.subr.mxu0 0.0
    %76 = vmatpush1.msra.mxu0 %v66
    %77 = vmatprep.subr.mxu0 0.0
    %78 = vmatpush1.msra.mxu0 %v67
    %79 = vmatprep.subr.mxu0 0.0
    %80 = vmatpush1.msra.mxu0 %v68
    %81 = vmatprep.subr.mxu0 0.0
    %82 = vmatpush1.msra.mxu0 0.0
    %83 = vmatprep.subr.mxu0 0.0
    %84 = vmatpush1.msra.mxu0 0.0
    %85 = vmatprep.subr.mxu0 0.0
    %86 = vmatpush1.msra.mxu0 0.0
    %87 = vmatprep.subr.mxu0 0.0
    %88 = vmatpush1.msra.mxu0 0.0
    %89 = vmatprep.subr.mxu0 0.0
    %90 = vmatpush1.msra.mxu0 0.0
    %91 = vmatprep.subr.mxu0 0.0
    %92 = vmatpush1.msra.mxu0 0.0
    %93 = vmatprep.subr.mxu0 0.0
    %94 = vmatpush1.msra.mxu0 0.0
    %95 = vmatprep.subr.mxu0 0.0
    %96 = vmatpush1.msra.mxu0 0.0
    %97 = vmatprep.subr.mxu0 0.0
    %98 = vmatpush1.msra.mxu0 0.0
    %99 = vmatprep.subr.mxu0 0.0
    %100 = vmatpush1.msra.mxu0 0.0
    %101 = vmatprep.subr.mxu0 0.0
    %102 = vmatpush1.msra.mxu0 0.0
    %103 = vmatprep.subr.mxu0 0.0
    %104 = vmatpush1.msra.mxu0 0.0
    %105 = vmatprep.subr.mxu0 0.0
    %106 = vmatpush1.msra.mxu0 0.0
    %107 = vmatprep.subr.mxu0 0.0
    %108 = vmatpush1.msra.mxu0 0.0
    %109 = vmatprep.subr.mxu0 0.0
    %110 = vmatpush1.msra.mxu0 0.0
    %111 = vmatprep.subr.mxu0 0.0
    %112 = vmatpush1.msra.mxu0 0.0
    %113 = vmatprep.subr.mxu0 0.0
    %114 = vmatpush1.msra.mxu0 0.0
    %115 = vmatprep.subr.mxu0 0.0
    %116 = vmatpush1.msra.mxu0 0.0
    %117 = vmatprep.subr.mxu0 0.0
    %118 = vmatpush1.msra.mxu0 0.0
    %119 = vmatprep.subr.mxu0 0.0
    %120 = vmatpush1.msra.mxu0 0.0
    %121 = vmatprep.subr.mxu0 0.0
    %122 = vmatpush1.msra.mxu0 0.0
    %123 = vmatprep.subr.mxu0 0.0
    %124 = vmatpush1.msra.mxu0 0.0
    %125 = vmatprep.subr.mxu0 0.0
    %126 = vmatpush1.msra.mxu0 0.0
    %127 = vmatprep.subr.mxu0 0.0
    %128 = vmatpush1.msra.mxu0 0.0
    %129 = vmatprep.subr.mxu0 0.0
    %130 = vmatpush1.msra.mxu0 0.0
    %131 = vmatprep.subr.mxu0 0.0
    %132 = vmatpush1.msra.mxu0 0.0
    %133 = vmatprep.subr.mxu0 0.0
    %134 = vmatpush1.msra.mxu0 0.0
    %135 = vmatprep.subr.mxu0 0.0
    %136 = vmatpush1.msra.mxu0 0.0
    %137 = vmatprep.mubr.f32.mxu0 0.0
    %138 = vmatmul.mubr.f32.gmra.mrb[0].mxu0 %v71
    %v139 = vpop.f32.mrb[0].mxu0
    %v140 = vadd.f32 0.0, %v139
    %v141 = vpop.f32.mrb[0].mxu0
    %142 = vdwg.mxu0
    %vm143 = vcmask 130048
    %v145 = vsel %vm143, %v61, 0
    %147 = vmatprep.subr.mxu0 0.0
    %148 = vmatpush1.msra.mxu0 %v62
    %149 = vmatprep.subr.mxu0 0.0
    %150 = vmatpush1.msra.mxu0 %v63
    %151 = vmatprep.subr.mxu0 0.0
    %152 = vmatpush1.msra.mxu0 0.0
    %153 = vmatprep.subr.mxu0 0.0
    %154 = vmatpush1.msra.mxu0 0.0
    %155 = vmatprep.subr.mxu0 0.0
    %156 = vmatpush1.msra.mxu0 0.0
    %157 = vmatprep.subr.mxu0 0.0
    %158 = vmatpush1.msra.mxu0 0.0
    %159 = vmatprep.subr.mxu0 0.0
    %160 = vmatpush1.msra.mxu0 0.0
    %161 = vmatprep.subr.mxu0 0.0
    %162 = vmatpush1.msra.mxu0 0.0
    %163 = vmatprep.subr.mxu0 0.0
    %164 = vmatpush1.msra.mxu0 0.0
    %165 = vmatprep.subr.mxu0 0.0
    %166 = vmatpush1.msra.mxu0 0.0
    %167 = vmatprep.subr.mxu0 0.0
    %168 = vmatpush1.msra.mxu0 0.0
    %169 = vmatprep.subr.mxu0 0.0
    %170 = vmatpush1.msra.mxu0 0.0
    %171 = vmatprep.subr.mxu0 0.0
    %172 = vmatpush1.msra.mxu0 0.0
    %173 = vmatprep.subr.mxu0 0.0
    %174 = vmatpush1.msra.mxu0 0.0
    %175 = vmatprep.subr.mxu0 0.0
    %176 = vmatpush1.msra.mxu0 0.0
    %177 = vmatprep.subr.mxu0 0.0
    %178 = vmatpush1.msra.mxu0 0.0
    %179 = vmatprep.subr.mxu0 0.0
    %180 = vmatpush1.msra.mxu0 0.0
    %181 = vmatprep.subr.mxu0 0.0
    %182 = vmatpush1.msra.mxu0 0.0
    %183 = vmatprep.subr.mxu0 0.0
    %184 = vmatpush1.msra.mxu0 0.0
    %185 = vmatprep.subr.mxu0 0.0
    %186 = vmatpush1.msra.mxu0 0.0
    %187 = vmatprep.subr.mxu0 0.0
    %188 = vmatpush1.msra.mxu0 0.0
    %189 = vmatprep.subr.mxu0 0.0
    %190 = vmatpush1.msra.mxu0 0.0
    %191 = vmatprep.subr.mxu0 0.0
    %192 = vmatpush1.msra.mxu0 0.0
    %193 = vmatprep.subr.mxu0 0.0
    %194 = vmatpush1.msra.mxu0 0.0
    %195 = vmatprep.subr.mxu0 0.0
    %196 = vmatpush1.msra.mxu0 0.0
    %197 = vmatprep.subr.mxu0 0.0
    %198 = vmatpush1.msra.mxu0 0.0
    %199 = vmatprep.subr.mxu0 0.0
    %200 = vmatpush1.msra.mxu0 0.0
    %201 = vmatprep.subr.mxu0 0.0
    %202 = vmatpush1.msra.mxu0 0.0
    %203 = vmatprep.subr.mxu0 0.0
    %204 = vmatpush1.msra.mxu0 0.0
    %205 = vmatprep.subr.mxu0 0.0
    %206 = vmatpush1.msra.mxu0 0.0
    %207 = vmatprep.subr.mxu0 0.0
    %208 = vmatpush1.msra.mxu0 0.0
    %209 = vmatprep.subr.mxu0 0.0
    %210 = vmatpush1.msra.mxu0 0.0
    %211 = vmatprep.mubr.f32.mxu0 0.0
    %212 = vmatmul.mubr.f32.gmra.mrb[0].mxu0 %v145
    %v213 = vpop.f32.mrb[0].mxu0
    %v214 = vadd.f32 %v140, %v213
    %v215 = vpop.f32.mrb[0].mxu0
    %216 = vdwg.mxu0
    %v217 = vld [vmem:[%s5] sm:$0x1]
    %v219 = vlaneseq
    %v220 = vshrl.u32 %v219, 7
    %v221 = vsub.s32 0, %v220
    %v222 = vrot.slane %v217, %v221
    %v224 = vadd.f32 %v214, %v222
    %v225 = vxor.u32 %v224, 2147483648
    %v226 = vmul.f32 %v225, 1.442695
    %v227 = vpow.pop %v226
    %v228 = vadd.f32 %v227, 1.0
    %v229 = vrcp.pop %v228
    %v230 = vmul.f32 1.0, %v229
    %231 = vrot.lane.b32.xlu0 %v230, 96
    %v232 = vpop.permute.xlu0 %231
    %233 = vrot.lane.b32.xlu0 %v224, 64
    %v234 = vpop.permute.xlu0 %233
    %235 = vrot.lane.b32.xlu0 %v224, 32
    %v236 = vpop.permute.xlu0 %235
    %v237 = vmul.f32 %v230, %v236
    %v238 = vadd.f32 %v234, %v237
    %v239 = vtanh.pop %v238
    %v240 = vld [vmem:[%s2] sm:$0xff]
    %242 = vset.pattern.permute.xlu0 0
    %243 = vperm.xlu0 %242, %v240
    %v244 = vpop.permute.xlu0 %243
    %v246 = vmul.f32 %v244, %v232
    %v247 = vsub.f32 %v239, %v64
    %v248 = vmul.f32 %v246, %v247
    %v249 = vadd.f32 %v64, %v248
    %250 = vst.msk [vmem:[#allocation8] sm:$0xff] %vm69, %v249
    // Predicated region
    $region38: #{tpu_custom_call.1} parent=1 // pred_check
      _
    $region39: #{tpu_custom_call.1} parent=1 // pred_check_branch
      %252 = sbr.rel (0) target = $region41
    $region40: #{tpu_custom_call.1} parent=1 // pred_region
      %s254 = ssub.s32 128, 128
      %255 = vsyncadd [#allocation4], %s254
      %s257 = sshll.u32 [#allocation8], 4
      %s258 = int_to_ptr.vmem [resolvable:$true] %s257
      %260 = dma.vmem_to_hbm [thread:$0]  %s258, 128, %s6, [#allocation4]
    $region41: #{tpu_custom_call.1} parent=1 // pred_fallthru
      _
    // Predicated region
    $region42: #{tpu_custom_call.1} parent=1 // pred_check
      _
    $region43: #{tpu_custom_call.1} parent=1 // pred_check_branch
      %262 = sbr.rel (0) target = $region45
    $region44: #{tpu_custom_call.1} parent=1 // pred_region
      %263 = dma.done [#allocation4], 128
    $region45: #{tpu_custom_call.1} parent=1 // pred_fallthru
      _
    %264 = vsyncpa [#allocation3], 1
    %265 = vsyncpa [#allocation6], 1
    %266 = vsyncpa [#allocation4], 1

</llo_original>
